<compile_context>
chip_gen: v6e
topology: v6e:2x2x1
jax: 0.10.0
libtpu: 0.0.40
codegen_flags: <defaults>
</compile_context>

<pallas_src>
import functools

import jax
import jax.numpy as jnp
from jax import lax
from jax.experimental import pallas as pl
from jax.experimental.pallas import tpu as pltpu


def _codebook_kernel(z_ref, e_dist_ref, e_gather_ref, e2_ref,
                     zq_ref, idx_ref, loss_ref, *, kp):
    """One grid step processes a channel-major (D, tm) tile of one batch image.

    z_ref       : (D, tm)      latent tile, channel-major (lane dim = tm)
    e_dist_ref  : (Kp, D)      codebook pre-scaled by -2 (f32 or bf16), resident
    e_gather_ref: (Kp, D)      f32 codebook for the exact one-hot gather, resident
    e2_ref      : (Kp, 1)      precomputed ||e||^2 (+1e30 on padded rows)
    zq_ref      : (D, tm)      quantized output tile, channel-major
    idx_ref     : (1, tm)      argmin codebook indices (int32), lane-dense
    loss_ref    : (1, 8, 128)  per-tile partial sum of (z_q - z)^2 (broadcast)
    """
    z_t = z_ref[...]                                  # (D, tm) input dtype
    z_f = z_t.astype(jnp.float32)

    # d[k, n] = ||e_k||^2 - 2 e_k . z_n      (||z_n||^2 dropped: per-column
    # constant, argmin over k is unchanged).  The -2 is folded into e_dist.
    ze = lax.dot_general(e_dist_ref[...], z_t.astype(e_dist_ref.dtype),
                         (((1,), (0,)), ((), ())),
                         preferred_element_type=jnp.float32)    # (Kp, tm)
    d = ze + e2_ref[...]                                         # (Kp, tm)

    # First-occurrence argmin over the codebook (sublane) axis, matching
    # torch.argmin tie-breaking.  Padded rows have d ~ 1e30 so never win.
    row_ids = lax.broadcasted_iota(jnp.int32, d.shape, 0)        # (Kp, tm)
    dmin = jnp.min(d, axis=0, keepdims=True)                     # (1, tm)
    idx = jnp.min(jnp.where(d == dmin, row_ids, kp), axis=0)     # (tm,)

    # Gather embedding rows via a one-hot matmul (MXU), f32 -> bit-exact z_q.
    one_hot = (row_ids == idx[None, :]).astype(jnp.float32)      # (Kp, tm)
    zq_t = lax.dot_general(e_gather_ref[...], one_hot,
                           (((0,), (0,)), ((), ())),
                           preferred_element_type=jnp.float32)   # (D, tm)

    zq_ref[...] = zq_t.astype(zq_ref.dtype)
    idx_ref[...] = idx[None, :]

    # Loss: mean((z_q.detach() - z)^2) + beta * mean((z_q - z.detach())^2).
    # Forward values of both terms are identical; emit per-tile partial sum,
    # final (1 + beta) * sum / (N * D) happens in the wrapper.
    diff = zq_t - z_f
    tile_sum = jnp.sum(diff * diff)
    loss_ref[...] = jnp.broadcast_to(tile_sum, loss_ref.shape).astype(
        loss_ref.dtype)


def _pick_tm(hw, kp, batch):
    """Largest 128-multiple divisor of hw under a VMEM-aware cap.

    The (Kp, tm) f32 intermediates (d / iota / one-hot) are the dominant live
    buffers; cap each at ~8 MiB so tm=512+ survives v7x's 64 MiB VMEM and
    v5e's 16 MiB scoped default even for large codebooks.
    """
    cap = max(128, min(1024, ((8 << 20) // (kp * 4)) // 128 * 128))
    tm = 0
    t = 128
    while t <= min(hw, cap):
        if hw % t == 0:
            tm = t
        t += 128
    if tm == 0:
        return hw  # spatial extent not 128-aligned: take the full row
    # Prefer >= 2 total grid steps so v7x megacore can use both TensorCores.
    if batch * (hw // tm) < 2:
        for t in range(tm - 128, 0, -128):
            if hw % t == 0 and batch * (hw // t) >= 2:
                tm = t
                break
    return tm


def codebook_forward(z_nchw, embedding, beta, *, tm=None):
    """VQ codebook forward. z_nchw: (B, C, H, W), embedding: (K, C)."""
    B, C, H, W = z_nchw.shape
    K, D = embedding.shape
    assert D == C, "latent_dim must match channel dim"

    HW = H * W
    N = B * HW

    # Pad the codebook to a sublane multiple (K sits on the sublane axis);
    # padded rows get a huge ||e||^2 so they can never win the argmin.
    Kp = max(8, ((K + 7) // 8) * 8)
    pad = Kp - K

    if tm is None:
        tm = _pick_tm(HW, Kp, B)
    assert HW % tm == 0, "H*W must be divisible by the tile width"
    assert tm % 128 == 0 or tm == HW, "tile lane dim must be 128-aligned"
    G = HW // tm

    emb_f32 = embedding.astype(jnp.float32)
    emb_p = jnp.pad(emb_f32, ((0, pad), (0, 0)))                 # (Kp, D) f32
    e2 = jnp.sum(emb_p * emb_p, axis=1, keepdims=True)           # (Kp, 1)
    if pad:
        e2 = e2.at[K:].set(1e30)                                 # guard rows

    # Distance-path codebook: -2 folded in; bf16 only when D is MXU-sized
    # (tiny D is pad-dominated anyway and f32 keeps argmin closest to torch).
    dist_dtype = jnp.bfloat16 if D >= 128 else jnp.float32
    e_dist = (-2.0 * emb_p).astype(dist_dtype)                   # (Kp, D)

    # NCHW is already channel-major per batch: no HBM transpose needed.
    z3 = z_nchw.reshape(B, C, HW)

    kernel = functools.partial(_codebook_kernel, kp=Kp)

    zq3, idx3, partials = pl.pallas_call(
        kernel,
        out_shape=(
            jax.ShapeDtypeStruct((B, C, HW), z_nchw.dtype),      # z_q
            jax.ShapeDtypeStruct((B, 1, HW), jnp.int32),         # indices
            jax.ShapeDtypeStruct((B, G, 8, 128), jnp.float32),   # loss partials
        ),
        grid_spec=pltpu.PrefetchScalarGridSpec(
            num_scalar_prefetch=0,
            grid=(B, G),
            in_specs=[
                pl.BlockSpec((None, C, tm), lambda b, i: (b, 0, i)),  # z tile
                pl.BlockSpec((Kp, D), lambda b, i: (0, 0)),           # -2*e
                pl.BlockSpec((Kp, D), lambda b, i: (0, 0)),           # e (f32)
                pl.BlockSpec((Kp, 1), lambda b, i: (0, 0)),           # ||e||^2
            ],
            out_specs=[
                pl.BlockSpec((None, C, tm), lambda b, i: (b, 0, i)),       # z_q
                pl.BlockSpec((None, 1, tm), lambda b, i: (b, 0, i)),       # idx
                pl.BlockSpec((None, 1, 8, 128), lambda b, i: (b, i, 0, 0)),  # loss
            ],
        ),
        compiler_params=pltpu.CompilerParams(
            dimension_semantics=("parallel", "parallel"),  # no cross-step state
            vmem_limit_bytes=48 * 1024 * 1024),            # > v5e 16MiB default, < v7x 64MiB
    )(z3, e_dist, emb_p, e2)

    # (b, 1, h*w) flattens in the same (b, h, w) order as torch's
    # permute(0,2,3,1).view(-1, D).
    min_encoding_indices = idx3.reshape(N)
    loss = (1.0 + beta) * jnp.sum(partials[:, :, 0, 0]) / float(N * D)

    # Straight-through estimator z + (z_q - z).detach() has the same forward
    # value as z_q.
    # TODO(synk): gradients (straight-through + detach semantics in the loss)
    # require a custom_vjp around this pallas_call; forward-only here.
    z_q = zq3.reshape(B, C, H, W)
    return z_q, min_encoding_indices, loss


if __name__ == "__main__":
    # Synthetic, deterministic setup (no checkpoint loading).
    num_codebook_vectors = 64
    latent_dim = 4
    beta = 0.25
    B, H, W = 2, 16, 16        # N = B*H*W = 512, grid = (2, 1)

    key = jax.random.PRNGKey(0)
    kz, ke = jax.random.split(key)
    z = jax.random.normal(kz, (B, latent_dim, H, W), dtype=jnp.float32)
    # nn.Embedding weight init: uniform(-1/K, 1/K)
    embedding = jax.random.uniform(
        ke, (num_codebook_vectors, latent_dim), dtype=jnp.float32,
        minval=-1.0 / num_codebook_vectors, maxval=1.0 / num_codebook_vectors)

    fwd = jax.jit(functools.partial(codebook_forward, beta=beta))
    z_q, indices, loss = fwd(z, embedding)
    jax.block_until_ready((z_q, indices, loss))

    # Shape checks.
    assert z_q.shape == (B, latent_dim, H, W)
    assert indices.shape == (B * H * W,)
    assert loss.shape == ()

    # Tie-robust correctness check against a pure-JAX reference.
    z_flat = jnp.transpose(z, (0, 2, 3, 1)).reshape(-1, latent_dim)
    d_ref = (jnp.sum(z_flat ** 2, axis=1, keepdims=True)
             + jnp.sum(embedding ** 2, axis=1)
             - 2.0 * z_flat @ embedding.T)
    picked = d_ref[jnp.arange(d_ref.shape[0]), indices]
    assert bool(jnp.all(picked <= d_ref.min(axis=1) + 1e-4)), "bad argmin"
    zq_ref = jnp.transpose(
        embedding[indices].reshape(B, H, W, latent_dim), (0, 3, 1, 2))
    assert bool(jnp.allclose(z_q, zq_ref, atol=1e-5)), "bad z_q gather"
    loss_ref = (1.0 + beta) * jnp.mean((zq_ref - z) ** 2)
    assert bool(jnp.allclose(loss, loss_ref, rtol=1e-5, atol=1e-7)), "bad loss"

    print("KERNEL_OK")
</pallas_src>

<mosaic_0001>
module attributes {stable_mosaic.version = 11 : i64} {
  func.func @_codebook_kernel(%arg0: i32, %arg1: i32, %arg2: memref<1x4x256xf32, #tpu.memory_space<vmem>>, %arg3: memref<64x4xf32, #tpu.memory_space<vmem>>, %arg4: memref<64x4xf32, #tpu.memory_space<vmem>>, %arg5: memref<64x1xf32, #tpu.memory_space<vmem>>, %arg6: memref<1x4x256xf32, #tpu.memory_space<vmem>>, %arg7: memref<1x1x256xi32, #tpu.memory_space<vmem>>, %arg8: memref<1x1x8x128xf32, #tpu.memory_space<vmem>>) attributes {dimension_semantics = [#tpu.dimension_semantics<parallel>, #tpu.dimension_semantics<parallel>], iteration_bounds = array<i64: 2, 1>, scalar_prefetch = 0 : i64, scratch_operands = 0 : i64, tpu.core_type = #tpu.core_type<tc>, window_params = [{transform_indices = @transform_0, window_bounds = array<i64: 1, 4, 256>}, {pipeline_mode = #tpu.pipeline_mode<synchronous>, transform_indices = @transform_1, window_bounds = array<i64: 64, 4>}, {pipeline_mode = #tpu.pipeline_mode<synchronous>, transform_indices = @transform_2, window_bounds = array<i64: 64, 4>}, {pipeline_mode = #tpu.pipeline_mode<synchronous>, transform_indices = @transform_3, window_bounds = array<i64: 64, 1>}, {transform_indices = @transform_4, window_bounds = array<i64: 1, 4, 256>}, {transform_indices = @transform_5, window_bounds = array<i64: 1, 1, 256>}, {transform_indices = @transform_6, window_bounds = array<i64: 1, 1, 8, 128>}]} {
    %c0 = arith.constant 0 : index
    %c0_0 = arith.constant 0 : index
    %c0_1 = arith.constant 0 : index
    %0 = vector.load %arg2[%c0, %c0_0, %c0_1] : memref<1x4x256xf32, #tpu.memory_space<vmem>>, vector<1x4x256xf32>
    %1 = vector.shape_cast %0 : vector<1x4x256xf32> to vector<4x256xf32>
    %c0_2 = arith.constant 0 : index
    %c0_3 = arith.constant 0 : index
    %2 = vector.load %arg3[%c0_2, %c0_3] : memref<64x4xf32, #tpu.memory_space<vmem>>, vector<64x4xf32>
    %cst = arith.constant dense<0.000000e+00> : vector<64x256xf32>
    %3 = tpu.matmul %2, %1, %cst {dimension_numbers = #tpu.dot_dimension_numbers<[1], [0], [0], [1], [0, 0, 1, 1], [], []>} : vector<64x4xf32>, vector<4x256xf32>, vector<64x256xf32> -> vector<64x256xf32>
    %c0_4 = arith.constant 0 : index
    %c0_5 = arith.constant 0 : index
    %4 = vector.load %arg5[%c0_4, %c0_5] : memref<64x1xf32, #tpu.memory_space<vmem>>, vector<64x1xf32>
    %5 = vector.broadcast %4 : vector<64x1xf32> to vector<64x256xf32>
    %6 = arith.addf %3, %5 : vector<64x256xf32>
    %7 = tpu.iota {dimensions = array<i32: 0>} : vector<64x256xi32>
    %cst_6 = arith.constant dense<0x7F800000> : vector<256xf32>
    %8 = vector.multi_reduction <minimumf>, %6, %cst_6 [0] : vector<64x256xf32> to vector<256xf32>
    %9 = vector.shape_cast %8 : vector<256xf32> to vector<1x256xf32>
    %10 = vector.broadcast %9 : vector<1x256xf32> to vector<64x256xf32>
    %11 = arith.cmpf oeq, %6, %10 : vector<64x256xf32>
    %c64_i32 = arith.constant 64 : i32
    %12 = vector.broadcast %c64_i32 : i32 to vector<64x256xi32>
    %13 = arith.select %11, %7, %12 : vector<64x256xi1>, vector<64x256xi32>
    %cst_7 = arith.constant dense<2147483647> : vector<256xi32>
    %14 = vector.multi_reduction <minsi>, %13, %cst_7 [0] : vector<64x256xi32> to vector<256xi32>
    %15 = vector.shape_cast %14 : vector<256xi32> to vector<1x256xi32>
    %16 = vector.broadcast %15 : vector<1x256xi32> to vector<64x256xi32>
    %17 = arith.cmpi eq, %7, %16 : vector<64x256xi32>
    %18 = arith.extui %17 : vector<64x256xi1> to vector<64x256xi32>
    %19 = arith.sitofp %18 : vector<64x256xi32> to vector<64x256xf32>
    %c0_8 = arith.constant 0 : index
    %c0_9 = arith.constant 0 : index
    %20 = vector.load %arg4[%c0_8, %c0_9] : memref<64x4xf32, #tpu.memory_space<vmem>>, vector<64x4xf32>
    %cst_10 = arith.constant dense<0.000000e+00> : vector<4x256xf32>
    %21 = tpu.matmul %20, %19, %cst_10 {dimension_numbers = #tpu.dot_dimension_numbers<[0], [0], [1], [1], [0, 1, 1, 1], [], []>} : vector<64x4xf32>, vector<64x256xf32>, vector<4x256xf32> -> vector<4x256xf32>
    %c0_11 = arith.constant 0 : index
    %c0_12 = arith.constant 0 : index
    %c0_13 = arith.constant 0 : index
    %22 = vector.load %arg6[%c0_11, %c0_12, %c0_13] : memref<1x4x256xf32, #tpu.memory_space<vmem>>, vector<1x4x256xf32>
    %23 = vector.shape_cast %22 : vector<1x4x256xf32> to vector<4x256xf32>
    %24 = vector.shape_cast %21 : vector<4x256xf32> to vector<1x4x256xf32>
    tpu.vector_store %arg6[%c0_11, %c0_12, %c0_13], %24 {strides = array<i32>} : memref<1x4x256xf32, #tpu.memory_space<vmem>>, vector<1x4x256xf32>,
    %25 = vector.shape_cast %14 : vector<256xi32> to vector<1x256xi32>
    %c0_14 = arith.constant 0 : index
    %c0_15 = arith.constant 0 : index
    %c0_16 = arith.constant 0 : index
    %26 = vector.load %arg7[%c0_14, %c0_15, %c0_16] : memref<1x1x256xi32, #tpu.memory_space<vmem>>, vector<1x1x256xi32>
    %27 = vector.shape_cast %26 : vector<1x1x256xi32> to vector<1x256xi32>
    %28 = vector.shape_cast %25 : vector<1x256xi32> to vector<1x1x256xi32>
    tpu.vector_store %arg7[%c0_14, %c0_15, %c0_16], %28 {strides = array<i32>} : memref<1x1x256xi32, #tpu.memory_space<vmem>>, vector<1x1x256xi32>,
    %29 = arith.subf %21, %1 : vector<4x256xf32>
    %30 = arith.mulf %29, %29 : vector<4x256xf32>
    %31 = vector.shape_cast %30 : vector<4x256xf32> to vector<1x4x256xf32>
    %cst_17 = arith.constant dense<0.000000e+00> : vector<1xf32>
    %32 = vector.multi_reduction <add>, %31, %cst_17 [1, 2] : vector<1x4x256xf32> to vector<1xf32>
    %33 = vector.shape_cast %32 : vector<1xf32> to vector<1x1x1xf32>
    %34 = vector.extract %33[0, 0, 0] : f32 from vector<1x1x1xf32>
    %35 = vector.broadcast %34 : f32 to vector<1x8x128xf32>
    %c0_18 = arith.constant 0 : index
    %c0_19 = arith.constant 0 : index
    %c0_20 = arith.constant 0 : index
    %c0_21 = arith.constant 0 : index
    %36 = vector.load %arg8[%c0_18, %c0_19, %c0_20, %c0_21] : memref<1x1x8x128xf32, #tpu.memory_space<vmem>>, vector<1x1x8x128xf32>
    %37 = vector.shape_cast %36 : vector<1x1x8x128xf32> to vector<1x8x128xf32>
    %38 = vector.shape_cast %35 : vector<1x8x128xf32> to vector<1x1x8x128xf32>
    tpu.vector_store %arg8[%c0_18, %c0_19, %c0_20, %c0_21], %38 {strides = array<i32>} : memref<1x1x8x128xf32, #tpu.memory_space<vmem>>, vector<1x1x8x128xf32>,
    return
  }
  func.func @transform_0(%arg0: i32, %arg1: i32) -> (i32, i32, i32) {
    %c0_i32 = arith.constant 0 : i32
    %c0_i32_0 = arith.constant 0 : i32
    return %arg0, %c0_i32, %arg1 : i32, i32, i32
  }
  func.func @transform_1(%arg0: i32, %arg1: i32) -> (i32, i32) {
    %c0_i32 = arith.constant 0 : i32
    %c0_i32_0 = arith.constant 0 : i32
    %c0_i32_1 = arith.constant 0 : i32
    return %c0_i32, %c0_i32_0 : i32, i32
  }
  func.func @transform_2(%arg0: i32, %arg1: i32) -> (i32, i32) {
    %c0_i32 = arith.constant 0 : i32
    %c0_i32_0 = arith.constant 0 : i32
    %c0_i32_1 = arith.constant 0 : i32
    return %c0_i32, %c0_i32_0 : i32, i32
  }
  func.func @transform_3(%arg0: i32, %arg1: i32) -> (i32, i32) {
    %c0_i32 = arith.constant 0 : i32
    %c0_i32_0 = arith.constant 0 : i32
    %c0_i32_1 = arith.constant 0 : i32
    return %c0_i32, %c0_i32_0 : i32, i32
  }
  func.func @transform_4(%arg0: i32, %arg1: i32) -> (i32, i32, i32) {
    %c0_i32 = arith.constant 0 : i32
    %c0_i32_0 = arith.constant 0 : i32
    return %arg0, %c0_i32, %arg1 : i32, i32, i32
  }
  func.func @transform_5(%arg0: i32, %arg1: i32) -> (i32, i32, i32) {
    %c0_i32 = arith.constant 0 : i32
    %c0_i32_0 = arith.constant 0 : i32
    return %arg0, %c0_i32, %arg1 : i32, i32, i32
  }
  func.func @transform_6(%arg0: i32, %arg1: i32) -> (i32, i32, i32, i32) {
    %c0_i32 = arith.constant 0 : i32
    %c0_i32_0 = arith.constant 0 : i32
    %c0_i32_1 = arith.constant 0 : i32
    return %arg0, %arg1, %c0_i32, %c0_i32_0 : i32, i32, i32, i32
  }
}

</mosaic_0001>

<llo_original>
// kernel: codebook_forward.1
$region0: #{codebook_forward.1}
  #allocation0 [shape = 'u32[]', space=smem, size = 0x4, offset = 0x4, fixed_abs, tag = 'smem constant byte address 0x4 - core index']
  #allocation1 [shape = 'u32[144,128]{1,0:T(1,128)}', space=vmem, size = 0x12000, scoped, tag = 'internal scratch']
  %s0 = inlined_call_operand.vmem [shape: f32[2,4,256], index: 0, kind: input, shape index: {}]
  %s1 = inlined_call_operand.vmem [shape: f32[64,4], index: 1, kind: input, shape index: {}]
  %s2 = inlined_call_operand.vmem [shape: f32[64,4], index: 2, kind: input, shape index: {}]
  %s3 = inlined_call_operand.vmem [shape: f32[64,1], index: 3, kind: input, shape index: {}]
  %s4 = inlined_call_operand.vmem [shape: f32[2,4,256], index: 4, kind: output, shape index: {0}]
  %s5 = inlined_call_operand.hbm [shape: s32[2,1,256], index: 5, kind: output, shape index: {1}]
  %s6 = inlined_call_operand.vmem [shape: f32[2,1,8,128], index: 6, kind: output, shape index: {2}]
  %7 = xla_tuple %s4, %s5, %s6
  %s8 = sld [smem:[#allocation0]]
  $region65: #{codebook_forward.1} parent=0
    _
  %s10 = ssub.s32 1, %s8
  %s11 = scalar_select 0, %s10, %s8
  $region1: #{codebook_forward.1} parent=0
    #allocation2 [shape = 'u8[2048]{0}', space=vmem, size = 0x800, scoped, tag = 'output window, operand 1']
    #allocation3 [shape = 's32[2]{0}', space=sflag, size = 0x8, scoped, tag = 'scoped memory for codebook_forward.1']
    %12 = vsyncpa [#allocation3], 0
    %s13 = scalar_lea.sflag [#allocation3], 1
    %14 = vsyncpa %s13, 0
    loop: start=0, step=1, limit=4
    $region2: #{codebook_forward.1} parent=1 // loop_pre_header
      _
    $region3: #{codebook_forward.1} parent=1 // loop_header
      %s16 = sphi 0, %s20
      %p17 = scmp.ge.s32.totalorder %s16, 4
      %s23 = sphi 0, %s35
      %s24 = sphi 0, %s31
      %s25 = sphi 0, %s23
      %s26 = sphi 0, %s24
      %s27 = sphi 0, %s25
      %s28 = sphi 0, %s26
      %s40 = sphi 0, %s42
      %s43 = sphi 0, %s40
      %s44 = sphi 0, %s43
      %s60 = sphi 0, %s44
      %s64 = sphi 0, %s64
      %s66 = sphi 0, %s64
      %s67 = sphi 0, %s66
      %s81 = sphi 0, %s67
      %s85 = sphi 0, %s85
      %s87 = sphi 0, %s85
      %s88 = sphi 0, %s87
      %s102 = sphi 0, %s88
      %s106 = sphi 0, %s106
      %s108 = sphi 0, %s106
      %s109 = sphi 0, %s108
      %s123 = sphi 0, %s109
      %s131 = sphi 0, %s133
      %s134 = sphi 0, %s131
      %s135 = sphi 0, %s134
      %s151 = sphi 0, %s135
      %s159 = sphi 0, %s161
      %s162 = sphi 0, %s159
      %s163 = sphi 0, %s162
      %s179 = sphi 0, %s163
      %s187 = sphi 0, %s189
      %s190 = sphi 0, %s187
      %s191 = sphi 0, %s190
      %s207 = sphi 0, %s191
    $region4: #{codebook_forward.1} parent=1 // loop_header_branch
      %19 = sbr.rel (%p17) target = $region8
    $region5: #{codebook_forward.1} parent=1 // loop_body
      %s21 = ssub.s32 %s16, 1
      %s22 = ssub.s32 %s16, 2
      %s29 = sadd.s32 1, %s24
      %p30 = scmp.ge.s32.totalorder %s29, 1
      %s31 = scalar_select %p30, 0, %s29
      %s32 = sadd.s32 1, %s23
      %s33 = scalar_select %p30, %s32, %s23
      %p34 = scmp.ge.s32.totalorder %s33, 2
      %s35 = scalar_select %p34, 0, %s33
      %s36 = ssub.s32 %s23, %s35
      %s37 = ssub.s32 %s24, %s31
      %s38 = sor.u32 %s36, %s37
      %p39 = scmp.eq.s32.totalorder %s38, 0
      %s41 = sadd.s32 %s40, 1
      %s42 = scalar_select %p39, %s40, %s41
      %p45 = pneg %p39
      %p46 = scmp.eq.s32.totalorder %s16, 1
      %p47 = por %p45, %p46
      %p48 = scmp.ne.s32.totalorder %s40, %s43
      %p49 = scmp.eq.s32.totalorder %s16, 0
      %p50 = por %p48, %p49
      %p51 = scmp.ne.s32.totalorder %s40, %s43
      %p52 = scmp.eq.s32.totalorder %s21, 1
      %p53 = por %p51, %p52
      %p54 = scmp.ne.s32.totalorder %s43, %s44
      %p55 = scmp.eq.s32.totalorder %s21, 0
      %p56 = por %p54, %p55
      %p57 = scmp.ne.s32.totalorder %s43, %s44
      %p58 = scmp.eq.s32.totalorder %s22, 1
      %p59 = por %p57, %p58
      %p61 = scmp.ne.s32.totalorder %s44, %s60
      %p62 = scmp.eq.s32.totalorder %s22, 0
      %p63 = por %p61, %p62
      %s65 = sadd.s32 %s64, 1
      %p68 = scmp.eq.s32.totalorder %s16, 1
      %p69 = scmp.ne.s32.totalorder %s64, %s66
      %p70 = scmp.eq.s32.totalorder %s16, 0
      %p71 = por %p69, %p70
      %p72 = scmp.ne.s32.totalorder %s64, %s66
      %p73 = scmp.eq.s32.totalorder %s21, 1
      %p74 = por %p72, %p73
      %p75 = scmp.ne.s32.totalorder %s66, %s67
      %p76 = scmp.eq.s32.totalorder %s21, 0
      %p77 = por %p75, %p76
      %p78 = scmp.ne.s32.totalorder %s66, %s67
      %p79 = scmp.eq.s32.totalorder %s22, 1
      %p80 = por %p78, %p79
      %p82 = scmp.ne.s32.totalorder %s67, %s81
      %p83 = scmp.eq.s32.totalorder %s22, 0
      %p84 = por %p82, %p83
      %s86 = sadd.s32 %s85, 1
      %p89 = scmp.eq.s32.totalorder %s16, 1
      %p90 = scmp.ne.s32.totalorder %s85, %s87
      %p91 = scmp.eq.s32.totalorder %s16, 0
      %p92 = por %p90, %p91
      %p93 = scmp.ne.s32.totalorder %s85, %s87
      %p94 = scmp.eq.s32.totalorder %s21, 1
      %p95 = por %p93, %p94
      %p96 = scmp.ne.s32.totalorder %s87, %s88
      %p97 = scmp.eq.s32.totalorder %s21, 0
      %p98 = por %p96, %p97
      %p99 = scmp.ne.s32.totalorder %s87, %s88
      %p100 = scmp.eq.s32.totalorder %s22, 1
      %p101 = por %p99, %p100
      %p103 = scmp.ne.s32.totalorder %s88, %s102
      %p104 = scmp.eq.s32.totalorder %s22, 0
      %p105 = por %p103, %p104
      %s107 = sadd.s32 %s106, 1
      %p110 = scmp.eq.s32.totalorder %s16, 1
      %p111 = scmp.ne.s32.totalorder %s106, %s108
      %p112 = scmp.eq.s32.totalorder %s16, 0
      %p113 = por %p111, %p112
      %p114 = scmp.ne.s32.totalorder %s106, %s108
      %p115 = scmp.eq.s32.totalorder %s21, 1
      %p116 = por %p114, %p115
      %p117 = scmp.ne.s32.totalorder %s108, %s109
      %p118 = scmp.eq.s32.totalorder %s21, 0
      %p119 = por %p117, %p118
      %p120 = scmp.ne.s32.totalorder %s108, %s109
      %p121 = scmp.eq.s32.totalorder %s22, 1
      %p122 = por %p120, %p121
      %p124 = scmp.ne.s32.totalorder %s109, %s123
      %p125 = scmp.eq.s32.totalorder %s22, 0
      %p126 = por %p124, %p125
      %s127 = ssub.s32 %s23, %s35
      %s128 = ssub.s32 %s24, %s31
      %s129 = sor.u32 %s127, %s128
      %p130 = scmp.eq.s32.totalorder %s129, 0
      %s132 = sadd.s32 %s131, 1
      %s133 = scalar_select %p130, %s131, %s132
      %p136 = pneg %p130
      %p137 = scmp.eq.s32.totalorder %s16, 1
      %p138 = por %p136, %p137
      %p139 = scmp.ne.s32.totalorder %s131, %s134
      %p140 = scmp.eq.s32.totalorder %s16, 0
      %p141 = por %p139, %p140
      %p142 = scmp.ne.s32.totalorder %s131, %s134
      %p143 = scmp.eq.s32.totalorder %s21, 1
      %p144 = por %p142, %p143
      %p145 = scmp.ne.s32.totalorder %s134, %s135
      %p146 = scmp.eq.s32.totalorder %s21, 0
      %p147 = por %p145, %p146
      %p148 = scmp.ne.s32.totalorder %s134, %s135
      %p149 = scmp.eq.s32.totalorder %s22, 1
      %p150 = por %p148, %p149
      %p152 = scmp.ne.s32.totalorder %s135, %s151
      %p153 = scmp.eq.s32.totalorder %s22, 0
      %p154 = por %p152, %p153
      %s155 = ssub.s32 %s23, %s35
      %s156 = ssub.s32 %s24, %s31
      %s157 = sor.u32 %s155, %s156
      %p158 = scmp.eq.s32.totalorder %s157, 0
      %s160 = sadd.s32 %s159, 1
      %s161 = scalar_select %p158, %s159, %s160
      %p164 = pneg %p158
      %p165 = scmp.eq.s32.totalorder %s16, 1
      %p166 = por %p164, %p165
      %p167 = scmp.ne.s32.totalorder %s159, %s162
      %p168 = scmp.eq.s32.totalorder %s16, 0
      %p169 = por %p167, %p168
      %p170 = scmp.ne.s32.totalorder %s159, %s162
      %p171 = scmp.eq.s32.totalorder %s21, 1
      %p172 = por %p170, %p171
      %p173 = scmp.ne.s32.totalorder %s162, %s163
      %p174 = scmp.eq.s32.totalorder %s21, 0
      %p175 = por %p173, %p174
      %p176 = scmp.ne.s32.totalorder %s162, %s163
      %p177 = scmp.eq.s32.totalorder %s22, 1
      %p178 = por %p176, %p177
      %p180 = scmp.ne.s32.totalorder %s163, %s179
      %p181 = scmp.eq.s32.totalorder %s22, 0
      %p182 = por %p180, %p181
      %s183 = ssub.s32 %s23, %s35
      %s184 = ssub.s32 %s24, %s31
      %s185 = sor.u32 %s183, %s184
      %p186 = scmp.eq.s32.totalorder %s185, 0
      %s188 = sadd.s32 %s187, 1
      %s189 = scalar_select %p186, %s187, %s188
      %p192 = pneg %p186
      %p193 = scmp.eq.s32.totalorder %s16, 1
      %p194 = por %p192, %p193
      %p195 = scmp.ne.s32.totalorder %s187, %s190
      %p196 = scmp.eq.s32.totalorder %s16, 0
      %p197 = por %p195, %p196
      %p198 = scmp.ne.s32.totalorder %s187, %s190
      %p199 = scmp.eq.s32.totalorder %s21, 1
      %p200 = por %p198, %p199
      %p201 = scmp.ne.s32.totalorder %s190, %s191
      %p202 = scmp.eq.s32.totalorder %s21, 0
      %p203 = por %p201, %p202
      %p204 = scmp.ne.s32.totalorder %s190, %s191
      %p205 = scmp.eq.s32.totalorder %s22, 1
      %p206 = por %p204, %p205
      %p208 = scmp.ne.s32.totalorder %s191, %s207
      %p209 = scmp.eq.s32.totalorder %s22, 0
      %p210 = por %p208, %p209
      %p211 = scmp.le.s32.totalorder 1, %s16
      %p212 = scmp.lt.s32.totalorder %s16, 3
      %p213 = pnand %p211, %p212
      %p214 = pneg %p213
      // Predicated region
      $region9: #{codebook_forward.1} parent=5 // pred_check
        _
      $region10: #{codebook_forward.1} parent=5 // pred_check_branch
        %216 = sbr.rel (%p213) target = $region12
      $region11: #{codebook_forward.1} parent=5 // pred_region
        %s217 = ssub.s32 %s16, 1
        // Predicated region
        $region13: #{codebook_forward.1} parent=11 // pred_check
          %p218 = pneg %p77
        $region14: #{codebook_forward.1} parent=11 // pred_check_branch
          %220 = sbr.rel (%p218) target = $region16
        $region15: #{codebook_forward.1} parent=11 // pred_region
          _
        $region16: #{codebook_forward.1} parent=11 // pred_fallthru
          _
        // Predicated region
        $region17: #{codebook_forward.1} parent=11 // pred_check
          %p221 = pneg %p98
        $region18: #{codebook_forward.1} parent=11 // pred_check_branch
          %223 = sbr.rel (%p221) target = $region20
        $region19: #{codebook_forward.1} parent=11 // pred_region
          _
        $region20: #{codebook_forward.1} parent=11 // pred_fallthru
          _
        // Predicated region
        $region21: #{codebook_forward.1} parent=11 // pred_check
          %p224 = pneg %p119
        $region22: #{codebook_forward.1} parent=11 // pred_check_branch
          %226 = sbr.rel (%p224) target = $region24
        $region23: #{codebook_forward.1} parent=11 // pred_region
          _
        $region24: #{codebook_forward.1} parent=11 // pred_fallthru
          _
      $region12: #{codebook_forward.1} parent=5 // pred_fallthru
        _
      %p227 = scmp.lt.s32.totalorder %s16, 2
      // Predicated region
      $region25: #{codebook_forward.1} parent=5 // pred_check
        %p228 = pneg %p227
      $region26: #{codebook_forward.1} parent=5 // pred_check_branch
        %230 = sbr.rel (%p228) target = $region28
      $region27: #{codebook_forward.1} parent=5 // pred_region
        // Predicated region
        $region29: #{codebook_forward.1} parent=27 // pred_check
          %p231 = pneg %p50
        $region30: #{codebook_forward.1} parent=27 // pred_check_branch
          %233 = sbr.rel (%p231) target = $region32
        $region31: #{codebook_forward.1} parent=27 // pred_region
          %s234 = smul.u32 2, %s24
          %p235 = scmp.lt.s32.totalorder %s23, 1
          %s236 = scalar_select %p235, %s23, 1
          %p237 = scmp.lt.s32.totalorder %s234, 1
          %s238 = scalar_select %p237, %s234, 1
          %s239 = smul.addr %s236, 2
          %s240 = sadd.s32 %s238, %s239
          %s241 = smul.addr %s240, 4
          %s242 = scalar_lea.vmem %s0, %s241
          %s243 = smul.u32 2, %s24
        $region32: #{codebook_forward.1} parent=27 // pred_fallthru
          _
      $region28: #{codebook_forward.1} parent=5 // pred_fallthru
        _
      %p244 = scmp.le.s32.totalorder 1, %s16
      %p245 = scmp.lt.s32.totalorder %s16, 3
      %p246 = pnand %p244, %p245
      %p247 = pneg %p246
      // Predicated region
      $region33: #{codebook_forward.1} parent=5 // pred_check
        _
      $region34: #{codebook_forward.1} parent=5 // pred_check_branch
        %249 = sbr.rel (%p246) target = $region36
      $region35: #{codebook_forward.1} parent=5 // pred_region
        %s250 = ssub.s32 %s16, 1
        %s251 = smul.u32 2, %s26
        %p252 = scmp.lt.s32.totalorder %s25, 1
        %s253 = scalar_select %p252, %s25, 1
        %p254 = scmp.lt.s32.totalorder %s251, 1
        %s255 = scalar_select %p254, %s251, 1
        %s256 = smul.addr %s253, 2
        %s257 = sadd.s32 %s255, %s256
        %s258 = smul.addr %s257, 4
        %s259 = scalar_lea.vmem %s0, %s258
        %p260 = pneg %p56
        %p261 = pneg %p53
        %p262 = pneg %p77
        %p263 = pneg %p74
        %p264 = pneg %p98
        %p265 = pneg %p95
        %p266 = pneg %p119
        %p267 = pneg %p116
        %p268 = pneg %p147
        %p269 = pneg %p144
        %s270 = smul.u32 2, %s26
        %p271 = scmp.lt.s32.totalorder %s25, 1
        %s272 = scalar_select %p271, %s25, 1
        %p273 = scmp.lt.s32.totalorder %s270, 1
        %s274 = scalar_select %p273, %s270, 1
        %s275 = smul.addr %s272, 2
        %s276 = sadd.s32 %s274, %s275
        %s277 = smul.addr %s276, 4
        %s278 = scalar_lea.vmem %s4, %s277
        %p279 = pneg %p175
        %p280 = pneg %p172
        %s281 = sand.u32 %s162, 1
        %s282 = scalar_lea.sflag [#allocation3], %s281
        %s283 = sand.u32 %s162, 1
        %s284 = smul.addr %s283, 2
        %s285 = scalar_lea.vmem [#allocation2], %s284
        %p286 = pneg %p203
        %p287 = pneg %p200
        %p288 = scmp.lt.s32.totalorder %s25, 1
        %s289 = scalar_select %p288, %s25, 1
        %p290 = scmp.lt.s32.totalorder %s26, 0
        %s291 = scalar_select %p290, %s26, 0
        %s292 = sadd.s32 %s291, %s289
        %s293 = smul.addr %s292, 8
        %s294 = scalar_lea.vmem %s6, %s293
        %s295 = smul.u32 2, %s26
        %p296 = scmp.lt.s32.totalorder %s25, 1
        %s297 = scalar_select %p296, %s25, 1
        %p298 = scmp.lt.s32.totalorder %s295, 1
        %s299 = scalar_select %p298, %s295, 1
        %s300 = smul.addr %s297, 2
        %s301 = sadd.s32 %s299, %s300
        %s302 = smul.addr %s301, 4
        %s303 = scalar_lea.vmem %s0, %s302
        %s304 = smul.u32 2, %s26
        %s305 = smul.u32 2, %s26
        %p306 = scmp.lt.s32.totalorder %s25, 1
        %s307 = scalar_select %p306, %s25, 1
        %p308 = scmp.lt.s32.totalorder %s305, 1
        %s309 = scalar_select %p308, %s305, 1
        %s310 = smul.addr %s307, 2
        %s311 = sadd.s32 %s309, %s310
        %s312 = smul.addr %s311, 4
        %s313 = scalar_lea.vmem %s4, %s312
        %s314 = smul.u32 2, %s26
        %s315 = smul.u32 2, %s26
        %p316 = scmp.lt.s32.totalorder %s25, 1
        %s317 = scalar_select %p316, %s25, 1
        %p318 = scmp.lt.s32.totalorder %s26, 0
        %s319 = scalar_select %p318, %s26, 0
        %s320 = sadd.s32 %s319, %s317
        %s321 = smul.addr %s320, 8
        %s322 = scalar_lea.vmem %s6, %s321
        %v323 = vld [vmem:[%s303] sm:$0xff]
        %v324 = vld [vmem:[%s1] sm:$0xff]
        %v325 = vld [vmem:[%s1 + $0x8] sm:$0xff]
        %v326 = vld [vmem:[%s1 + $0x10] sm:$0xff]
        %v327 = vld [vmem:[%s1 + $0x18] sm:$0xff]
        %v328 = vld [vmem:[%s1 + $0x20] sm:$0xff]
        %v329 = vld [vmem:[%s1 + $0x28] sm:$0xff]
        %v330 = vld [vmem:[%s1 + $0x30] sm:$0xff]
        %v331 = vld [vmem:[%s1 + $0x38] sm:$0xff]
        %v332 = vld [vmem:[%s3] sm:$0xff]
        %v333 = vld [vmem:[%s3 + $0x8] sm:$0xff]
        %v334 = vld [vmem:[%s3 + $0x10] sm:$0xff]
        %v335 = vld [vmem:[%s3 + $0x18] sm:$0xff]
        %v336 = vld [vmem:[%s3 + $0x20] sm:$0xff]
        %v337 = vld [vmem:[%s3 + $0x28] sm:$0xff]
        %v338 = vld [vmem:[%s3 + $0x30] sm:$0xff]
        %v339 = vld [vmem:[%s3 + $0x38] sm:$0xff]
        %341 = vset.pattern.permute.xlu0 0
        %342 = vperm.xlu0 %341, %v332
        %v343 = vpop.permute.xlu0 %342
        %346 = vset.pattern.permute.xlu0 0
        %347 = vperm.xlu0 %346, %v333
        %v348 = vpop.permute.xlu0 %347
        %351 = vset.pattern.permute.xlu0 0
        %352 = vperm.xlu0 %351, %v334
        %v353 = vpop.permute.xlu0 %352
        %356 = vset.pattern.permute.xlu0 0
        %357 = vperm.xlu0 %356, %v335
        %v358 = vpop.permute.xlu0 %357
        %361 = vset.pattern.permute.xlu0 0
        %362 = vperm.xlu0 %361, %v336
        %v363 = vpop.permute.xlu0 %362
        %366 = vset.pattern.permute.xlu0 0
        %367 = vperm.xlu0 %366, %v337
        %v368 = vpop.permute.xlu0 %367
        %371 = vset.pattern.permute.xlu0 0
        %372 = vperm.xlu0 %371, %v338
        %v373 = vpop.permute.xlu0 %372
        %376 = vset.pattern.permute.xlu0 0
        %377 = vperm.xlu0 %376, %v339
        %v378 = vpop.permute.xlu0 %377
        %v381 = vcombine.high %v323, %v323
        %vm382 = vcmask 31744
        %v384 = vsel %vm382, %v324, 0
        %v387 = vsel %vm382, %v325, 0
        %v390 = vsel %vm382, %v326, 0
        %v393 = vsel %vm382, %v327, 0
        %v396 = vsel %vm382, %v328, 0
        %v399 = vsel %vm382, %v329, 0
        %v402 = vsel %vm382, %v330, 0
        %v405 = vsel %vm382, %v331, 0
        %vm407 = vcmask 1043456
        %v408 = vsel %vm407, %v323, 0
        %v410 = vsel %vm407, %v381, 0
        %412 = vmatprep.subr.mxu0 0.0
        %413 = vmatpush1.msra.mxu0 0.0
        %414 = vmatprep.subr.mxu0 0.0
        %415 = vmatpush1.msra.mxu0 0.0
        %416 = vmatprep.subr.mxu0 0.0
        %417 = vmatpush1.msra.mxu0 0.0
        %418 = vmatprep.subr.mxu0 0.0
        %419 = vmatpush1.msra.mxu0 0.0
        %420 = vmatprep.subr.mxu0 0.0
        %421 = vmatpush1.msra.mxu0 0.0
        %422 = vmatprep.subr.mxu0 0.0
        %423 = vmatpush1.msra.mxu0 0.0
        %424 = vmatprep.subr.mxu0 0.0
        %425 = vmatpush1.msra.mxu0 0.0
        %426 = vmatprep.subr.mxu0 0.0
        %427 = vmatpush1.msra.mxu0 0.0
        %428 = vmatprep.subr.mxu0 0.0
        %429 = vmatpush1.msra.mxu0 0.0
        %430 = vmatprep.subr.mxu0 0.0
        %431 = vmatpush1.msra.mxu0 0.0
        %432 = vmatprep.subr.mxu0 0.0
        %433 = vmatpush1.msra.mxu0 0.0
        %434 = vmatprep.subr.mxu0 0.0
        %435 = vmatpush1.msra.mxu0 0.0
        %436 = vmatprep.subr.mxu0 0.0
        %437 = vmatpush1.msra.mxu0 0.0
        %438 = vmatprep.subr.mxu0 0.0
        %439 = vmatpush1.msra.mxu0 0.0
        %440 = vmatprep.subr.mxu0 0.0
        %441 = vmatpush1.msra.mxu0 0.0
        %442 = vmatprep.subr.mxu0 %v410
        %443 = vmatpush1.msra.mxu0 %v408
        %444 = vmatprep.subr.mxu0 0.0
        %445 = vmatpush2.msra.mxu0 0.0
        %446 = vmatprep.subr.mxu0 0.0
        %447 = vmatpush2.msra.mxu0 0.0
        %448 = vmatprep.subr.mxu0 0.0
        %449 = vmatpush2.msra.mxu0 0.0
        %450 = vmatprep.subr.mxu0 0.0
        %451 = vmatpush2.msra.mxu0 0.0
        %452 = vmatprep.subr.mxu0 0.0
        %453 = vmatpush2.msra.mxu0 0.0
        %454 = vmatprep.subr.mxu0 0.0
        %455 = vmatpush2.msra.mxu0 0.0
        %456 = vmatprep.subr.mxu0 0.0
        %457 = vmatpush2.msra.mxu0 0.0
        %458 = vmatprep.subr.mxu0 0.0
        %459 = vmatpush2.msra.mxu0 0.0
        %460 = vmatprep.subr.mxu0 0.0
        %461 = vmatpush2.msra.mxu0 0.0
        %462 = vmatprep.subr.mxu0 0.0
        %463 = vmatpush2.msra.mxu0 0.0
        %464 = vmatprep.subr.mxu0 0.0
        %465 = vmatpush2.msra.mxu0 0.0
        %466 = vmatprep.subr.mxu0 0.0
        %467 = vmatpush2.msra.mxu0 0.0
        %468 = vmatprep.subr.mxu0 0.0
        %469 = vmatpush2.msra.mxu0 0.0
        %470 = vmatprep.subr.mxu0 0.0
        %471 = vmatpush2.msra.mxu0 0.0
        %472 = vmatprep.subr.mxu0 0.0
        %473 = vmatpush2.msra.mxu0 0.0
        %474 = vmatprep.subr.mxu0 0.0
        %475 = vmatpush2.msra.mxu0 0.0
        %476 = vmatprep.mubr.f32.mxu0 0.0
        %477 = vmatmul.mubr.f32.gmra.mxu0 %v384
        %v478 = vpop.f32.mrf.mxu0
        %v479 = vadd.f32 %v343, %v478
        %v480 = vpop.f32.mrf.mxu0
        %v481 = vadd.f32 %v343, %v480
        %482 = vmatprep.mubr.f32.mxu0 0.0
        %483 = vmatmul.mubr.f32.gmra.mxu0 %v387
        %v484 = vpop.f32.mrf.mxu0
        %v485 = vadd.f32 %v348, %v484
        %v486 = vpop.f32.mrf.mxu0
        %v487 = vadd.f32 %v348, %v486
        %488 = vmatprep.mubr.f32.mxu0 0.0
        %489 = vmatmul.mubr.f32.gmra.mxu0 %v390
        %v490 = vpop.f32.mrf.mxu0
        %v491 = vadd.f32 %v353, %v490
        %v492 = vpop.f32.mrf.mxu0
        %v493 = vadd.f32 %v353, %v492
        %494 = vmatprep.mubr.f32.mxu0 0.0
        %495 = vmatmul.mubr.f32.gmra.mxu0 %v393
        %v496 = vpop.f32.mrf.mxu0
        %v497 = vadd.f32 %v358, %v496
        %v498 = vpop.f32.mrf.mxu0
        %v499 = vadd.f32 %v358, %v498
        %500 = vmatprep.mubr.f32.mxu0 0.0
        %501 = vmatmul.mubr.f32.gmra.mxu0 %v396
        %v502 = vpop.f32.mrf.mxu0
        %v503 = vadd.f32 %v363, %v502
        %v504 = vpop.f32.mrf.mxu0
        %v505 = vadd.f32 %v363, %v504
        %506 = vmatprep.mubr.f32.mxu0 0.0
        %507 = vmatmul.mubr.f32.gmra.mxu0 %v399
        %v508 = vpop.f32.mrf.mxu0
        %v509 = vadd.f32 %v368, %v508
        %v510 = vpop.f32.mrf.mxu0
        %v511 = vadd.f32 %v368, %v510
        %512 = vmatprep.mubr.f32.mxu0 0.0
        %513 = vmatmul.mubr.f32.gmra.mxu0 %v402
        %v514 = vpop.f32.mrf.mxu0
        %v515 = vadd.f32 %v373, %v514
        %v516 = vpop.f32.mrf.mxu0
        %v517 = vadd.f32 %v373, %v516
        %518 = vmatprep.mubr.f32.mxu0 0.0
        %519 = vmatmul.mubr.f32.gmra.mxu0 %v405
        %v520 = vpop.f32.mrf.mxu0
        %v521 = vadd.f32 %v378, %v520
        %v522 = vpop.f32.mrf.mxu0
        %v523 = vadd.f32 %v378, %v522
        %524 = vdwg.mxu0
        %v525 = vlaneseq
        %v526 = vshrl.u32 %v525, 7
        %v527 = vadd.s32 %v526, 8
        %v528 = vadd.s32 %v526, 16
        %v529 = vadd.s32 %v526, 24
        %v530 = vadd.s32 %v526, 32
        %v531 = vadd.s32 %v526, 40
        %v532 = vadd.s32 %v526, 48
        %v533 = vadd.s32 %v526, 56
        %v534 = vmin.f32 %v479, %v491
        %v535 = vmin.f32 %v485, %v497
        %v536 = vmin.f32 %v534, %v503
        %v537 = vmin.f32 %v535, %v509
        %v538 = vmin.f32 %v536, %v515
        %v539 = vmin.f32 %v537, %v521
        %v540 = vmin.f32 %v538, %v539
        %v541 = vrot.slane %v540, 4
        %v542 = vmin.f32 %v540, %v541
        %v543 = vrot.slane %v542, 2
        %v544 = vmin.f32 %v542, %v543
        %v545 = vrot.slane %v544, 1
        %v546 = vmin.f32 %v544, %v545
        %v547 = vmin.f32 %v481, %v493
        %v548 = vmin.f32 %v487, %v499
        %v549 = vmin.f32 %v547, %v505
        %v550 = vmin.f32 %v548, %v511
        %v551 = vmin.f32 %v549, %v517
        %v552 = vmin.f32 %v550, %v523
        %v553 = vmin.f32 %v551, %v552
        %v554 = vrot.slane %v553, 4
        %v555 = vmin.f32 %v553, %v554
        %v556 = vrot.slane %v555, 2
        %v557 = vmin.f32 %v555, %v556
        %v558 = vrot.slane %v557, 1
        %v559 = vmin.f32 %v557, %v558
        %vm560 = vcmp.eq.f32.partialorder %v479, %v546
        %vm561 = vcmp.eq.f32.partialorder %v481, %v559
        %vm562 = vcmp.eq.f32.partialorder %v485, %v546
        %vm563 = vcmp.eq.f32.partialorder %v487, %v559
        %vm564 = vcmp.eq.f32.partialorder %v491, %v546
        %vm565 = vcmp.eq.f32.partialorder %v493, %v559
        %vm566 = vcmp.eq.f32.partialorder %v497, %v546
        %vm567 = vcmp.eq.f32.partialorder %v499, %v559
        %vm568 = vcmp.eq.f32.partialorder %v503, %v546
        %vm569 = vcmp.eq.f32.partialorder %v505, %v559
        %vm570 = vcmp.eq.f32.partialorder %v509, %v546
        %vm571 = vcmp.eq.f32.partialorder %v511, %v559
        %vm572 = vcmp.eq.f32.partialorder %v515, %v546
        %vm573 = vcmp.eq.f32.partialorder %v517, %v559
        %vm574 = vcmp.eq.f32.partialorder %v521, %v546
        %vm575 = vcmp.eq.f32.partialorder %v523, %v559
        %v576 = vsel %vm560, %v526, 64
        %v577 = vsel %vm561, %v526, 64
        %v578 = vsel %vm562, %v527, 64
        %v579 = vsel %vm563, %v527, 64
        %v580 = vsel %vm564, %v528, 64
        %v581 = vsel %vm565, %v528, 64
        %v582 = vsel %vm566, %v529, 64
        %v583 = vsel %vm567, %v529, 64
        %v584 = vsel %vm568, %v530, 64
        %v585 = vsel %vm569, %v530, 64
        %v586 = vsel %vm570, %v531, 64
        %v587 = vsel %vm571, %v531, 64
        %v588 = vsel %vm572, %v532, 64
        %v589 = vsel %vm573, %v532, 64
        %v590 = vsel %vm574, %v533, 64
        %v591 = vsel %vm575, %v533, 64
        %vm592 = vcmp.lt.s32.totalorder %v576, %v580
        %v593 = vsel %vm592, %v576, %v580
        %vm594 = vcmp.lt.s32.totalorder %v578, %v582
        %v595 = vsel %vm594, %v578, %v582
        %vm596 = vcmp.lt.s32.totalorder %v593, %v584
        %v597 = vsel %vm596, %v593, %v584
        %vm598 = vcmp.lt.s32.totalorder %v595, %v586
        %v599 = vsel %vm598, %v595, %v586
        %vm600 = vcmp.lt.s32.totalorder %v597, %v588
        %v601 = vsel %vm600, %v597, %v588
        %vm602 = vcmp.lt.s32.totalorder %v599, %v590
        %v603 = vsel %vm602, %v599, %v590
        %vm604 = vcmp.lt.s32.totalorder %v601, %v603
        %v605 = vsel %vm604, %v601, %v603
        %v606 = vrot.slane %v605, 4
        %vm607 = vcmp.lt.s32.totalorder %v605, %v606
        %v608 = vsel %vm607, %v605, %v606
        %v609 = vrot.slane %v608, 2
        %vm610 = vcmp.lt.s32.totalorder %v608, %v609
        %v611 = vsel %vm610, %v608, %v609
        %v612 = vrot.slane %v611, 1
        %vm613 = vcmp.lt.s32.totalorder %v611, %v612
        %v614 = vsel %vm613, %v611, %v612
        %vm615 = vcmp.lt.s32.totalorder %v577, %v581
        %v616 = vsel %vm615, %v577, %v581
        %vm617 = vcmp.lt.s32.totalorder %v579, %v583
        %v618 = vsel %vm617, %v579, %v583
        %vm619 = vcmp.lt.s32.totalorder %v616, %v585
        %v620 = vsel %vm619, %v616, %v585
        %vm621 = vcmp.lt.s32.totalorder %v618, %v587
        %v622 = vsel %vm621, %v618, %v587
        %vm623 = vcmp.lt.s32.totalorder %v620, %v589
        %v624 = vsel %vm623, %v620, %v589
        %vm625 = vcmp.lt.s32.totalorder %v622, %v591
        %v626 = vsel %vm625, %v622, %v591
        %vm627 = vcmp.lt.s32.totalorder %v624, %v626
        %v628 = vsel %vm627, %v624, %v626
        %v629 = vrot.slane %v628, 4
        %vm630 = vcmp.lt.s32.totalorder %v628, %v629
        %v631 = vsel %vm630, %v628, %v629
        %v632 = vrot.slane %v631, 2
        %vm633 = vcmp.lt.s32.totalorder %v631, %v632
        %v634 = vsel %vm633, %v631, %v632
        %v635 = vrot.slane %v634, 1
        %vm636 = vcmp.lt.s32.totalorder %v634, %v635
        %v637 = vsel %vm636, %v634, %v635
        %vm638 = vcmp.eq.s32.totalorder %v526, %v614
        %vm639 = vcmp.eq.s32.totalorder %v526, %v637
        %vm640 = vcmp.eq.s32.totalorder %v527, %v614
        %vm641 = vcmp.eq.s32.totalorder %v527, %v637
        %vm642 = vcmp.eq.s32.totalorder %v528, %v614
        %vm643 = vcmp.eq.s32.totalorder %v528, %v637
        %vm644 = vcmp.eq.s32.totalorder %v529, %v614
        %vm645 = vcmp.eq.s32.totalorder %v529, %v637
        %vm646 = vcmp.eq.s32.totalorder %v530, %v614
        %vm647 = vcmp.eq.s32.totalorder %v530, %v637
        %vm648 = vcmp.eq.s32.totalorder %v531, %v614
        %vm649 = vcmp.eq.s32.totalorder %v531, %v637
        %vm650 = vcmp.eq.s32.totalorder %v532, %v614
        %vm651 = vcmp.eq.s32.totalorder %v532, %v637
        %vm652 = vcmp.eq.s32.totalorder %v533, %v614
        %vm653 = vcmp.eq.s32.totalorder %v533, %v637
        %v654 = vsel %vm638, 1, 0
        %v655 = vsel %vm639, 1, 0
        %v656 = vsel %vm640, 1, 0
        %v657 = vsel %vm641, 1, 0
        %v658 = vsel %vm642, 1, 0
        %v659 = vsel %vm643, 1, 0
        %v660 = vsel %vm644, 1, 0
        %v661 = vsel %vm645, 1, 0
        %v662 = vsel %vm646, 1, 0
        %v663 = vsel %vm647, 1, 0
        %v664 = vsel %vm648, 1, 0
        %v665 = vsel %vm649, 1, 0
        %v666 = vsel %vm650, 1, 0
        %v667 = vsel %vm651, 1, 0
        %v668 = vsel %vm652, 1, 0
        %v669 = vsel %vm653, 1, 0
        %v670 = vcvt.s32.f32 %v654
        %v671 = vcvt.s32.f32 %v655
        %v672 = vcvt.s32.f32 %v656
        %v673 = vcvt.s32.f32 %v657
        %v674 = vcvt.s32.f32 %v658
        %v675 = vcvt.s32.f32 %v659
        %v676 = vcvt.s32.f32 %v660
        %v677 = vcvt.s32.f32 %v661
        %v678 = vcvt.s32.f32 %v662
        %v679 = vcvt.s32.f32 %v663
        %v680 = vcvt.s32.f32 %v664
        %v681 = vcvt.s32.f32 %v665
        %v682 = vcvt.s32.f32 %v666
        %v683 = vcvt.s32.f32 %v667
        %v684 = vcvt.s32.f32 %v668
        %v685 = vcvt.s32.f32 %v669
        %v686 = vld [vmem:[%s2] sm:$0xff]
        %v687 = vld [vmem:[%s2 + $0x8] sm:$0xff]
        %v688 = vld [vmem:[%s2 + $0x10] sm:$0xff]
        %v689 = vld [vmem:[%s2 + $0x18] sm:$0xff]
        %v690 = vld [vmem:[%s2 + $0x20] sm:$0xff]
        %v691 = vld [vmem:[%s2 + $0x28] sm:$0xff]
        %v692 = vld [vmem:[%s2 + $0x30] sm:$0xff]
        %v693 = vld [vmem:[%s2 + $0x38] sm:$0xff]
        %694 = vxpose.xlu0.b32.start [1/16] %v686, 128
        %695 = vxpose.xlu0.b32.cont [2/16] %v687, 128
        %696 = vxpose.xlu0.b32.cont [3/16] %v688, 128
        %697 = vxpose.xlu0.b32.cont [4/16] %v689, 128
        %698 = vxpose.xlu0.b32.cont [5/16] %v690, 128
        %699 = vxpose.xlu0.b32.cont [6/16] %v691, 128
        %700 = vxpose.xlu0.b32.cont [7/16] %v692, 128
        %701 = vxpose.xlu0.b32.cont [8/16] %v693, 128
        %702 = vxpose.xlu0.b32.cont [9/16] 0.0, 128
        %703 = vxpose.xlu0.b32.cont [10/16] 0.0, 128
        %704 = vxpose.xlu0.b32.cont [11/16] 0.0, 128
        %705 = vxpose.xlu0.b32.cont [12/16] 0.0, 128
        %706 = vxpose.xlu0.b32.cont [13/16] 0.0, 128
        %707 = vxpose.xlu0.b32.cont [14/16] 0.0, 128
        %708 = vxpose.xlu0.b32.cont [15/16] 0.0, 128
        %709 = vxpose.xlu0.b32.end [16/16] 0.0, 128
        %v710 = vpop.trf.xlu0
        %v711 = vpop.trf.xlu0
        %v712 = vpop.trf.xlu0
        %v713 = vpop.trf.xlu0
        %v714 = vpop.trf.xlu0
        %v715 = vpop.trf.xlu0
        %v716 = vpop.trf.xlu0
        %v717 = vpop.trf.xlu0
        %v718 = vpop.trf.xlu0
        %v719 = vpop.trf.xlu0
        %v720 = vpop.trf.xlu0
        %v721 = vpop.trf.xlu0
        %v722 = vpop.trf.xlu0
        %v723 = vpop.trf.xlu0
        %v724 = vpop.trf.xlu0
        %v725 = vpop.trf.xlu0
        %vm726 = vcmask 523264
        %v728 = vsel %vm726, %v710, 0
        %730 = vmatprep.subr.mxu0 0.0
        %731 = vmatpush1.msra.mxu0 0.0
        %732 = vmatprep.subr.mxu0 0.0
        %733 = vmatpush1.msra.mxu0 0.0
        %734 = vmatprep.subr.mxu0 0.0
        %735 = vmatpush1.msra.mxu0 0.0
        %736 = vmatprep.subr.mxu0 0.0
        %737 = vmatpush1.msra.mxu0 0.0
        %738 = vmatprep.subr.mxu0 0.0
        %739 = vmatpush1.msra.mxu0 0.0
        %740 = vmatprep.subr.mxu0 0.0
        %741 = vmatpush1.msra.mxu0 0.0
        %742 = vmatprep.subr.mxu0 0.0
        %743 = vmatpush1.msra.mxu0 0.0
        %744 = vmatprep.subr.mxu0 0.0
        %745 = vmatpush1.msra.mxu0 0.0
        %746 = vmatprep.subr.mxu0 %v685
        %747 = vmatpush1.msra.mxu0 %v684
        %748 = vmatprep.subr.mxu0 %v683
        %749 = vmatpush1.msra.mxu0 %v682
        %750 = vmatprep.subr.mxu0 %v681
        %751 = vmatpush1.msra.mxu0 %v680
        %752 = vmatprep.subr.mxu0 %v679
        %753 = vmatpush1.msra.mxu0 %v678
        %754 = vmatprep.subr.mxu0 %v677
        %755 = vmatpush1.msra.mxu0 %v676
        %756 = vmatprep.subr.mxu0 %v675
        %757 = vmatpush1.msra.mxu0 %v674
        %758 = vmatprep.subr.mxu0 %v673
        %759 = vmatpush1.msra.mxu0 %v672
        %760 = vmatprep.subr.mxu0 %v671
        %761 = vmatpush1.msra.mxu0 %v670
        %762 = vmatprep.subr.mxu0 0.0
        %763 = vmatpush2.msra.mxu0 0.0
        %764 = vmatprep.subr.mxu0 0.0
        %765 = vmatpush2.msra.mxu0 0.0
        %766 = vmatprep.subr.mxu0 0.0
        %767 = vmatpush2.msra.mxu0 0.0
        %768 = vmatprep.subr.mxu0 0.0
        %769 = vmatpush2.msra.mxu0 0.0
        %770 = vmatprep.subr.mxu0 0.0
        %771 = vmatpush2.msra.mxu0 0.0
        %772 = vmatprep.subr.mxu0 0.0
        %773 = vmatpush2.msra.mxu0 0.0
        %774 = vmatprep.subr.mxu0 0.0
        %775 = vmatpush2.msra.mxu0 0.0
        %776 = vmatprep.subr.mxu0 0.0
        %777 = vmatpush2.msra.mxu0 0.0
        %778 = vmatprep.subr.mxu0 0.0
        %779 = vmatpush2.msra.mxu0 0.0
        %780 = vmatprep.subr.mxu0 0.0
        %781 = vmatpush2.msra.mxu0 0.0
        %782 = vmatprep.subr.mxu0 0.0
        %783 = vmatpush2.msra.mxu0 0.0
        %784 = vmatprep.subr.mxu0 0.0
        %785 = vmatpush2.msra.mxu0 0.0
        %786 = vmatprep.subr.mxu0 0.0
        %787 = vmatpush2.msra.mxu0 0.0
        %788 = vmatprep.subr.mxu0 0.0
        %789 = vmatpush2.msra.mxu0 0.0
        %790 = vmatprep.subr.mxu0 0.0
        %791 = vmatpush2.msra.mxu0 0.0
        %792 = vmatprep.subr.mxu0 0.0
        %793 = vmatpush2.msra.mxu0 0.0
        %794 = vmatprep.mubr.f32.mxu0 0.0
        %795 = vmatmul.mubr.f32.gmra.mxu0 %v728
        %v796 = vpop.f32.mrf.mxu0
        %v797 = vadd.f32 0.0, %v796
        %v798 = vpop.f32.mrf.mxu0
        %v799 = vadd.f32 0.0, %v798
        %800 = vdwg.mxu0
        %v803 = vcombine.low %v797, %v799
        %805 = vst [vmem:[%s313] sm:$0xff] %v803
        %v806 = vcombine.low %v614, %v637
        %v808 = vunpack.c.l.s4 1966171168
        %v809 = vunpack.c.0.s8 %v808
        %v810 = vlaneseq
        %v811 = vshrl.u32 %v810, 7
        %v812 = vsub.s32 %v809, %v811
        %v813 = vrot.slane %v806, %v812
        %v815 = vunpack.c.l.s4 1966171168
        %v816 = vunpack.c.0.s8 %v815
        %v817 = vlaneseq
        %v818 = vshrl.u32 %v817, 7
        %v819 = vsub.s32 %v816, %v818
        %v820 = vrot.slane %v813, %v819
        %v821 = vlaneseq
        %vm822 = vcmp.ge.s32.totalorder %v821, 0
        %vm823 = vcmp.lt.s32.totalorder %v821, 256
        %vm824 = vmand %vm822, %vm823
        %825 = vst.msk [vmem:[%s285] sm:$0x3] %vm824, %v820
        %v827 = vsub.f32 %v797, %v323
        %v828 = vsub.f32 %v799, %v381
        %v829 = vmul.f32 %v827, %v827
        %v830 = vmul.f32 %v828, %v828
        %v831 = vsel %vm407, %v829, 0.0
        %v832 = vsel %vm407, %v830, 0.0
        %v833 = vadd.f32 %v831, %v832
        %834 = vadd.xlane.f32.xlu0 %v833
        %v835 = vpop.xlane.xlu0 %834
        %v836 = vrot.slane %v835, 4
        %v837 = vadd.f32 %v835, %v836
        %v838 = vrot.slane %v837, 2
        %v839 = vadd.f32 %v837, %v838
        %v840 = vrot.slane %v839, 1
        %v841 = vadd.f32 %v839, %v840
        %s842 = vtos %v841
        %v843 = vstv %s842
        %844 = vst [vmem:[%s322] sm:$0xff] %v843
        %s845 = smul.u32 2, %s26
        %p846 = scmp.lt.s32.totalorder %s25, 1
        %s847 = scalar_select %p846, %s25, 1
        %p848 = scmp.lt.s32.totalorder %s845, 1
        %s849 = scalar_select %p848, %s845, 1
        %s850 = smul.addr %s847, 2
        %s851 = sadd.s32 %s849, %s850
        %s852 = smul.addr %s851, 4
        %s853 = scalar_lea.vmem %s4, %s852
        %s854 = sand.u32 %s162, 1
        %s855 = scalar_lea.sflag [#allocation3], %s854
        %s856 = sand.u32 %s162, 1
        %s857 = smul.addr %s856, 2
        %s858 = scalar_lea.vmem [#allocation2], %s857
        %p859 = scmp.lt.s32.totalorder %s25, 1
        %s860 = scalar_select %p859, %s25, 1
        %p861 = scmp.lt.s32.totalorder %s26, 0
        %s862 = scalar_select %p861, %s26, 0
        %s863 = sadd.s32 %s862, %s860
        %s864 = smul.addr %s863, 8
        %s865 = scalar_lea.vmem %s6, %s864
        // Predicated region
        $region37: #{codebook_forward.1} parent=35 // pred_check
          %p866 = pneg %p144
        $region38: #{codebook_forward.1} parent=35 // pred_check_branch
          %868 = sbr.rel (%p866) target = $region40
        $region39: #{codebook_forward.1} parent=35 // pred_region
          %s869 = smul.u32 2, %s26
        $region40: #{codebook_forward.1} parent=35 // pred_fallthru
          _
        // Predicated region
        $region41: #{codebook_forward.1} parent=35 // pred_check
          %p870 = pneg %p172
        $region42: #{codebook_forward.1} parent=35 // pred_check_branch
          %872 = sbr.rel (%p870) target = $region44
        $region43: #{codebook_forward.1} parent=35 // pred_region
          %s873 = smul.u32 2, %s26
          %s875 = ssub.s32 32, 32
          %876 = vsyncadd %s855, %s875
          %s877 = smul.addr %s25, 2
          %s878 = sadd.s32 %s873, %s877
          %s879 = smul.addr %s878, 16
          %s880 = scalar_lea.hbm %s5, %s879
          %s882 = sshll.u32 %s858, 4
          %s883 = int_to_ptr.vmem [resolvable:$true] %s882
          %885 = dma.vmem_to_hbm [thread:$0]  %s883, 32, %s880, %s855
        $region44: #{codebook_forward.1} parent=35 // pred_fallthru
          _
        // Predicated region
        $region45: #{codebook_forward.1} parent=35 // pred_check
          %p886 = pneg %p200
        $region46: #{codebook_forward.1} parent=35 // pred_check_branch
          %888 = sbr.rel (%p886) target = $region48
        $region47: #{codebook_forward.1} parent=35 // pred_region
          _
        $region48: #{codebook_forward.1} parent=35 // pred_fallthru
          _
      $region36: #{codebook_forward.1} parent=5 // pred_fallthru
        _
      %p889 = scmp.le.s32.totalorder 2, %s16
      // Predicated region
      $region49: #{codebook_forward.1} parent=5 // pred_check
        %p890 = pneg %p889
      $region50: #{codebook_forward.1} parent=5 // pred_check_branch
        %892 = sbr.rel (%p890) target = $region52
      $region51: #{codebook_forward.1} parent=5 // pred_region
        %s893 = ssub.s32 %s16, 2
        // Predicated region
        $region53: #{codebook_forward.1} parent=51 // pred_check
          %p894 = pneg %p150
        $region54: #{codebook_forward.1} parent=51 // pred_check_branch
          %896 = sbr.rel (%p894) target = $region56
        $region55: #{codebook_forward.1} parent=51 // pred_region
          %s897 = smul.u32 2, %s28
          %p898 = scmp.lt.s32.totalorder %s27, 1
          %s899 = scalar_select %p898, %s27, 1
          %p900 = scmp.lt.s32.totalorder %s897, 1
          %s901 = scalar_select %p900, %s897, 1
          %s902 = smul.addr %s899, 2
          %s903 = sadd.s32 %s901, %s902
          %s904 = smul.addr %s903, 4
          %s905 = scalar_lea.vmem %s4, %s904
        $region56: #{codebook_forward.1} parent=51 // pred_fallthru
          _
        // Predicated region
        $region57: #{codebook_forward.1} parent=51 // pred_check
          %p906 = pneg %p178
        $region58: #{codebook_forward.1} parent=51 // pred_check_branch
          %908 = sbr.rel (%p906) target = $region60
        $region59: #{codebook_forward.1} parent=51 // pred_region
          %s909 = sand.u32 %s163, 1
          %s910 = scalar_lea.sflag [#allocation3], %s909
          %s911 = sand.u32 %s163, 1
          %s912 = smul.addr %s911, 2
          %s913 = scalar_lea.vmem [#allocation2], %s912
          %914 = dma.done %s910, 32
        $region60: #{codebook_forward.1} parent=51 // pred_fallthru
          _
        // Predicated region
        $region61: #{codebook_forward.1} parent=51 // pred_check
          %p915 = pneg %p206
        $region62: #{codebook_forward.1} parent=51 // pred_check_branch
          %917 = sbr.rel (%p915) target = $region64
        $region63: #{codebook_forward.1} parent=51 // pred_region
          %p918 = scmp.lt.s32.totalorder %s27, 1
          %s919 = scalar_select %p918, %s27, 1
          %p920 = scmp.lt.s32.totalorder %s28, 0
          %s921 = scalar_select %p920, %s28, 0
          %s922 = sadd.s32 %s921, %s919
          %s923 = smul.addr %s922, 8
          %s924 = scalar_lea.vmem %s6, %s923
        $region64: #{codebook_forward.1} parent=51 // pred_fallthru
          _
      $region52: #{codebook_forward.1} parent=5 // pred_fallthru
        _
    $region6: #{codebook_forward.1} parent=1 // loop_footer
      %s20 = sadd.s32 1, %s16
    $region7: #{codebook_forward.1} parent=1 // loop_footer_branch
      %15 = sbr.rel target = $region3
    $region8: #{codebook_forward.1} parent=1 // loop_exit
      _
    %925 = vsyncpa [#allocation3], 1
    %s926 = scalar_lea.sflag [#allocation3], 1
    %927 = vsyncpa %s926, 1

</llo_original>
